<compile_context>
chip_gen: v5e
topology: v5e:2x2
jax: 0.10.0
libtpu: 0.0.40
codegen_flags: <defaults>
</compile_context>

<pallas_src>
import jax
import jax.numpy as jnp
from jax.experimental import pallas as pl
from jax.experimental.pallas import tpu as pltpu

EMB, IN, H1, H2, OUT = 32, 64, 512, 128, 1  # (32|32)=64 -> 512 -> 128 -> 1


def simnet_kernel(x_ref, w1_ref, b1_ref, w2_ref, b2_ref, w3_ref, b3_ref, o_ref):
    # fc1 + ReLU : single K=64 bf16 matmul, f32 accumulation.
    h1 = jnp.dot(x_ref[...], w1_ref[...], preferred_element_type=jnp.float32)
    h1 = jnp.maximum(h1 + b1_ref[...], 0.0)

    # fc2 + ReLU : cast h1 to bf16 only at the MXU boundary.
    h2 = jnp.dot(h1.astype(jnp.bfloat16), w2_ref[...],
                 preferred_element_type=jnp.float32)
    h2 = jnp.maximum(h2 + b2_ref[...], 0.0)

    # fc3 + sigmoid : (1,128) contracted against h2's feature axis gives a
    # lane-dense (1, block_b) row of logits (no N=1 matmul, no lane-width-1
    # output store).  bf16 h2 halves any transpose traffic of this head.
    logit = jax.lax.dot_general(
        w3_ref[...], h2.astype(jnp.bfloat16),
        dimension_numbers=(((1,), (1,)), ((), ())),
        preferred_element_type=jnp.float32,
    ) + b3_ref[0, 0]
    o_ref[...] = jax.nn.sigmoid(logit).astype(o_ref.dtype)


def _round_up(x, m):
    return (x + m - 1) // m * m


@jax.jit
def simnet_forward(db_item_emb, query_emb, params):
    w1, b1, w2, b2, w3_row, b3 = params
    B = db_item_emb.shape[0]

    # Lane-aligned tiles (multiple of 128); split into >= 2 grid steps as soon
    # as the batch allows (both v7x TCs busy); cap at 2048 rows so tiles stay
    # well under any generation's scoped-VMEM default while amortizing the
    # ~0.35us per-grid-step overhead.
    block_b = min(2048, max(128, _round_up(pl.cdiv(B, 2), 128)))
    B_pad = _round_up(B, block_b)

    # Concatenate once in the wrapper (fc1 becomes one K=64 matmul) and cast
    # the matmul operands to bf16.  Biases stay f32.
    x = jnp.concatenate([db_item_emb, query_emb], axis=1)
    if B_pad != B:
        x = jnp.pad(x, ((0, B_pad - B), (0, 0)))
    x = x.astype(jnp.bfloat16)
    w1b = w1.astype(jnp.bfloat16)
    w2b = w2.astype(jnp.bfloat16)
    w3b = w3_row.astype(jnp.bfloat16)

    grid = (B_pad // block_b,)
    full = lambda i: (0, 0)  # weights/biases: same (whole) block every step

    weight_bytes = 2 * (IN * H1 + H1 * H2 + H2) + 4 * (H1 + H2 + 1)
    cost = pl.CostEstimate(
        flops=2 * B_pad * (IN * H1 + H1 * H2 + H2 * OUT),
        transcendentals=2 * B_pad,  # sigmoid ~= exp + reciprocal per row
        bytes_accessed=2 * B_pad * IN + 4 * B_pad + weight_bytes,
    )

    out_row = pl.pallas_call(
        simnet_kernel,
        out_shape=jax.ShapeDtypeStruct((1, B_pad), jnp.float32),
        grid_spec=pltpu.PrefetchScalarGridSpec(
            num_scalar_prefetch=0,
            grid=grid,
            in_specs=[
                pl.BlockSpec((block_b, IN), lambda i: (i, 0)),       # x tile (bf16)
                pl.BlockSpec((IN, H1), full),                        # w1 (bf16)
                pl.BlockSpec((1, H1), full),                         # b1 (f32)
                pl.BlockSpec((H1, H2), full),                        # w2 (bf16)
                pl.BlockSpec((1, H2), full),                         # b2 (f32)
                pl.BlockSpec((1, H2), full),                         # w3 row (bf16)
                pl.BlockSpec(memory_space=pltpu.MemorySpace.SMEM),   # b3 scalar
            ],
            out_specs=pl.BlockSpec((1, block_b), lambda i: (0, i)),
        ),
        compiler_params=pltpu.CompilerParams(
            dimension_semantics=("parallel",),
        ),
        cost_estimate=cost,
    )(x, w1b, b1, w2b, b2, w3b, b3)

    # Back to the module's (B, 1) sim_score layout; drop padded rows.
    return out_row[0, :B].reshape(B, 1)


def init_params(key):
    """Deterministic init matching nn.Linear (torch default U(+-1/sqrt(fan_in)))."""
    ks = jax.random.split(key, 6)

    def linear(kw, kb, fan_in, fan_out):
        bound = 1.0 / (fan_in ** 0.5)
        w = jax.random.uniform(kw, (fan_in, fan_out), jnp.float32, -bound, bound)
        b = jax.random.uniform(kb, (1, fan_out), jnp.float32, -bound, bound)
        return w, b

    w1, b1 = linear(ks[0], ks[1], IN, H1)
    w2, b2 = linear(ks[2], ks[3], H1, H2)
    w3, b3 = linear(ks[4], ks[5], H2, OUT)
    # fc3 weight stored as a (1, 128) row (== torch fc3.weight layout).
    return (w1, b1, w2, b2, w3.T, b3)


def reference(db, q, params):
    """Pure-JAX f32 forward of the same math (torch semantics)."""
    w1, b1, w2, b2, w3_row, b3 = params
    x = jnp.concatenate([db, q], axis=1)
    h1 = jnp.maximum(x @ w1 + b1, 0.0)
    h2 = jnp.maximum(h1 @ w2 + b2, 0.0)
    return jax.nn.sigmoid(h2 @ w3_row.T + b3)


if __name__ == "__main__":
    key = jax.random.PRNGKey(0)
    kp, kdata = jax.random.split(key)
    params = init_params(kp)

    # Three batch sizes: lane-aligned, ragged (padding path), and one that
    # exercises the multi-step grid (B=200 -> two 128-row tiles).
    for B in (64, 50, 200):
        kd, kq = jax.random.split(jax.random.fold_in(kdata, B))
        db_item_emb = jax.random.normal(kd, (B, EMB), jnp.float32)
        query_emb = jax.random.normal(kq, (B, EMB), jnp.float32)

        out = simnet_forward(db_item_emb, query_emb, params)
        jax.block_until_ready(out)

        ref = reference(db_item_emb, query_emb, params)
        assert out.shape == (B, 1), out.shape
        # bf16 matmul operands -> tolerance relaxed vs the pure-f32 reference.
        err = float(jnp.max(jnp.abs(out - ref)))
        assert err < 2e-2, f"max abs error {err} at B={B}"

    print("KERNEL_OK")
</pallas_src>

<mosaic_0001>
module attributes {stable_mosaic.version = 11 : i64} {
  func.func @simnet_kernel(%arg0: i32, %arg1: memref<128x64xbf16, #tpu.memory_space<vmem>>, %arg2: memref<64x512xbf16, #tpu.memory_space<vmem>>, %arg3: memref<1x512xf32, #tpu.memory_space<vmem>>, %arg4: memref<512x128xbf16, #tpu.memory_space<vmem>>, %arg5: memref<1x128xf32, #tpu.memory_space<vmem>>, %arg6: memref<1x128xbf16, #tpu.memory_space<vmem>>, %arg7: memref<1x1xf32, #tpu.memory_space<smem>>, %arg8: memref<1x128xf32, #tpu.memory_space<vmem>>) attributes {dimension_semantics = [#tpu.dimension_semantics<parallel>], iteration_bounds = array<i64: 1>, scalar_prefetch = 0 : i64, scratch_operands = 0 : i64, tpu.core_type = #tpu.core_type<tc>, window_params = [{transform_indices = @transform_0, window_bounds = array<i64: 128, 64>}, {pipeline_mode = #tpu.pipeline_mode<synchronous>, transform_indices = @transform_1, window_bounds = array<i64: 64, 512>}, {pipeline_mode = #tpu.pipeline_mode<synchronous>, transform_indices = @transform_2, window_bounds = array<i64: 1, 512>}, {pipeline_mode = #tpu.pipeline_mode<synchronous>, transform_indices = @transform_3, window_bounds = array<i64: 512, 128>}, {pipeline_mode = #tpu.pipeline_mode<synchronous>, transform_indices = @transform_4, window_bounds = array<i64: 1, 128>}, {pipeline_mode = #tpu.pipeline_mode<synchronous>, transform_indices = @transform_5, window_bounds = array<i64: 1, 128>}, {transform_indices = @transform_6, window_bounds = array<i64: 1, 1>}, {transform_indices = @transform_7, window_bounds = array<i64: 1, 128>}]} {
    %c0 = arith.constant 0 : index
    %c0_0 = arith.constant 0 : index
    %0 = vector.load %arg1[%c0, %c0_0] : memref<128x64xbf16, #tpu.memory_space<vmem>>, vector<128x64xbf16>
    %c0_1 = arith.constant 0 : index
    %c0_2 = arith.constant 0 : index
    %1 = vector.load %arg2[%c0_1, %c0_2] : memref<64x512xbf16, #tpu.memory_space<vmem>>, vector<64x512xbf16>
    %cst = arith.constant dense<0.000000e+00> : vector<128x512xf32>
    %2 = tpu.matmul %0, %1, %cst {dimension_numbers = #tpu.dot_dimension_numbers<[1], [0], [0], [1], [0, 0, 1, 1], [], []>} : vector<128x64xbf16>, vector<64x512xbf16>, vector<128x512xf32> -> vector<128x512xf32>
    %c0_3 = arith.constant 0 : index
    %c0_4 = arith.constant 0 : index
    %3 = vector.load %arg3[%c0_3, %c0_4] : memref<1x512xf32, #tpu.memory_space<vmem>>, vector<1x512xf32>
    %4 = vector.broadcast %3 : vector<1x512xf32> to vector<128x512xf32>
    %5 = arith.addf %2, %4 : vector<128x512xf32>
    %cst_5 = arith.constant 0.000000e+00 : f32
    %6 = vector.broadcast %cst_5 : f32 to vector<128x512xf32>
    %7 = arith.maximumf %5, %6 : vector<128x512xf32>
    %8 = arith.truncf %7 : vector<128x512xf32> to vector<128x512xbf16>
    %c0_6 = arith.constant 0 : index
    %c0_7 = arith.constant 0 : index
    %9 = vector.load %arg4[%c0_6, %c0_7] : memref<512x128xbf16, #tpu.memory_space<vmem>>, vector<512x128xbf16>
    %cst_8 = arith.constant dense<0.000000e+00> : vector<128x128xf32>
    %10 = tpu.matmul %8, %9, %cst_8 {dimension_numbers = #tpu.dot_dimension_numbers<[1], [0], [0], [1], [0, 0, 1, 1], [], []>} : vector<128x512xbf16>, vector<512x128xbf16>, vector<128x128xf32> -> vector<128x128xf32>
    %c0_9 = arith.constant 0 : index
    %c0_10 = arith.constant 0 : index
    %11 = vector.load %arg5[%c0_9, %c0_10] : memref<1x128xf32, #tpu.memory_space<vmem>>, vector<1x128xf32>
    %12 = vector.broadcast %11 : vector<1x128xf32> to vector<128x128xf32>
    %13 = arith.addf %10, %12 : vector<128x128xf32>
    %cst_11 = arith.constant 0.000000e+00 : f32
    %14 = vector.broadcast %cst_11 : f32 to vector<128x128xf32>
    %15 = arith.maximumf %13, %14 : vector<128x128xf32>
    %c0_12 = arith.constant 0 : index
    %c0_13 = arith.constant 0 : index
    %16 = vector.load %arg6[%c0_12, %c0_13] : memref<1x128xbf16, #tpu.memory_space<vmem>>, vector<1x128xbf16>
    %17 = arith.truncf %15 : vector<128x128xf32> to vector<128x128xbf16>
    %cst_14 = arith.constant dense<0.000000e+00> : vector<1x128xf32>
    %18 = tpu.matmul %16, %17, %cst_14 {dimension_numbers = #tpu.dot_dimension_numbers<[1], [1], [0], [0], [0, 0, 1, 0], [], []>} : vector<1x128xbf16>, vector<128x128xbf16>, vector<1x128xf32> -> vector<1x128xf32>
    %c0_15 = arith.constant 0 : index
    %c0_16 = arith.constant 0 : index
    %19 = memref.load %arg7[%c0_15, %c0_16] : memref<1x1xf32, #tpu.memory_space<smem>>
    %20 = vector.broadcast %19 : f32 to vector<1x128xf32>
    %21 = arith.addf %18, %20 : vector<1x128xf32>
    %22 = arith.negf %21 : vector<1x128xf32>
    %23 = math.exp %22 : vector<1x128xf32>
    %cst_17 = arith.constant 1.000000e+00 : f32
    %24 = vector.broadcast %cst_17 : f32 to vector<1x128xf32>
    %25 = arith.addf %24, %23 : vector<1x128xf32>
    %26 = arith.divf %24, %25 : vector<1x128xf32>
    %c0_18 = arith.constant 0 : index
    %c0_19 = arith.constant 0 : index
    %27 = vector.load %arg8[%c0_18, %c0_19] : memref<1x128xf32, #tpu.memory_space<vmem>>, vector<1x128xf32>
    tpu.vector_store %arg8[%c0_18, %c0_19], %26 {strides = array<i32>} : memref<1x128xf32, #tpu.memory_space<vmem>>, vector<1x128xf32>,
    return
  }
  func.func @transform_0(%arg0: i32) -> (i32, i32) {
    %c0_i32 = arith.constant 0 : i32
    %c0_i32_0 = arith.constant 0 : i32
    return %arg0, %c0_i32 : i32, i32
  }
  func.func @transform_1(%arg0: i32) -> (i32, i32) {
    %c0_i32 = arith.constant 0 : i32
    %c0_i32_0 = arith.constant 0 : i32
    %c0_i32_1 = arith.constant 0 : i32
    return %c0_i32, %c0_i32_0 : i32, i32
  }
  func.func @transform_2(%arg0: i32) -> (i32, i32) {
    %c0_i32 = arith.constant 0 : i32
    %c0_i32_0 = arith.constant 0 : i32
    %c0_i32_1 = arith.constant 0 : i32
    return %c0_i32, %c0_i32_0 : i32, i32
  }
  func.func @transform_3(%arg0: i32) -> (i32, i32) {
    %c0_i32 = arith.constant 0 : i32
    %c0_i32_0 = arith.constant 0 : i32
    %c0_i32_1 = arith.constant 0 : i32
    return %c0_i32, %c0_i32_0 : i32, i32
  }
  func.func @transform_4(%arg0: i32) -> (i32, i32) {
    %c0_i32 = arith.constant 0 : i32
    %c0_i32_0 = arith.constant 0 : i32
    %c0_i32_1 = arith.constant 0 : i32
    return %c0_i32, %c0_i32_0 : i32, i32
  }
  func.func @transform_5(%arg0: i32) -> (i32, i32) {
    %c0_i32 = arith.constant 0 : i32
    %c0_i32_0 = arith.constant 0 : i32
    %c0_i32_1 = arith.constant 0 : i32
    return %c0_i32, %c0_i32_0 : i32, i32
  }
  func.func @transform_6(%arg0: i32) -> (i32, i32) {
    %c0_i32 = arith.constant 0 : i32
    %c0_i32_0 = arith.constant 0 : i32
    %c0_i32_1 = arith.constant 0 : i32
    return %c0_i32, %c0_i32_0 : i32, i32
  }
  func.func @transform_7(%arg0: i32) -> (i32, i32) {
    %c0_i32 = arith.constant 0 : i32
    %c0_i32_0 = arith.constant 0 : i32
    return %c0_i32, %arg0 : i32, i32
  }
}

</mosaic_0001>

<llo_original>
// kernel: simnet_forward.1
$region0: #{simnet_forward.1}
  #allocation0 [shape = 'u32[]', space=smem, size = 0x4, offset = 0x4, fixed_abs, tag = 'smem constant byte address 0x4 - core index']
  #allocation1 [shape = 'u32[72,128]{1,0:T(1,128)}', space=vmem, size = 0x9000, scoped, tag = 'internal scratch']
  #allocation2 [shape = 'f32[1,1]{1,0:T(1,128)S(6)}', space=smem, size = 0x200, scoped, tag = 'scoped memory for simnet_forward.1']
  %s0 = inlined_call_operand.vmem [shape: bf16[128,64], index: 0, kind: input, shape index: {}]
  %s1 = inlined_call_operand.vmem [shape: bf16[64,512], index: 1, kind: input, shape index: {}]
  %s2 = inlined_call_operand.vmem [shape: f32[1,512], index: 2, kind: input, shape index: {}]
  %s3 = inlined_call_operand.vmem [shape: bf16[512,128], index: 3, kind: input, shape index: {}]
  %s4 = inlined_call_operand.vmem [shape: f32[1,128], index: 4, kind: input, shape index: {}]
  %s5 = inlined_call_operand.vmem [shape: bf16[1,128], index: 5, kind: input, shape index: {}]
  %s6 = inlined_call_operand.<no memory space> [shape: f32[1,1], index: 6, kind: input, shape index: {}]
  %s7 = inlined_call_operand.vmem [shape: f32[1,128], index: 7, kind: output, shape index: {}]
  %s8 = sld [smem:[#allocation0]]
  $region38: #{simnet_forward.1} parent=0
    _
  %s10 = ssub.s32 1, %s8
  %s11 = scalar_select 0, %s10, %s8
  %12 = sst [smem:[#allocation2]] %s6
  // Predicated region
  $region2: #{simnet_forward.1} parent=0 // pred_check
    _
  $region3: #{simnet_forward.1} parent=0 // pred_check_branch
    %14 = sbr.rel (0) target = $region5
  $region4: #{simnet_forward.1} parent=0 // pred_region
    _
  $region5: #{simnet_forward.1} parent=0 // pred_fallthru
    _
  // Predicated region
  $region6: #{simnet_forward.1} parent=0 // pred_check
    _
  $region7: #{simnet_forward.1} parent=0 // pred_check_branch
    %16 = sbr.rel (0) target = $region9
  $region8: #{simnet_forward.1} parent=0 // pred_region
    _
  $region9: #{simnet_forward.1} parent=0 // pred_fallthru
    _
  // Predicated region
  $region10: #{simnet_forward.1} parent=0 // pred_check
    _
  $region11: #{simnet_forward.1} parent=0 // pred_check_branch
    %18 = sbr.rel (0) target = $region13
  $region12: #{simnet_forward.1} parent=0 // pred_region
    _
  $region13: #{simnet_forward.1} parent=0 // pred_fallthru
    _
  // Predicated region
  $region14: #{simnet_forward.1} parent=0 // pred_check
    _
  $region15: #{simnet_forward.1} parent=0 // pred_check_branch
    %20 = sbr.rel (0) target = $region17
  $region16: #{simnet_forward.1} parent=0 // pred_region
    _
  $region17: #{simnet_forward.1} parent=0 // pred_fallthru
    _
  // Predicated region
  $region18: #{simnet_forward.1} parent=0 // pred_check
    _
  $region19: #{simnet_forward.1} parent=0 // pred_check_branch
    %22 = sbr.rel (0) target = $region21
  $region20: #{simnet_forward.1} parent=0 // pred_region
    _
  $region21: #{simnet_forward.1} parent=0 // pred_fallthru
    _
  // Predicated region
  $region22: #{simnet_forward.1} parent=0 // pred_check
    _
  $region23: #{simnet_forward.1} parent=0 // pred_check_branch
    %24 = sbr.rel (0) target = $region25
  $region24: #{simnet_forward.1} parent=0 // pred_region
    _
  $region25: #{simnet_forward.1} parent=0 // pred_fallthru
    _
  // Predicated region
  $region26: #{simnet_forward.1} parent=0 // pred_check
    _
  $region27: #{simnet_forward.1} parent=0 // pred_check_branch
    %26 = sbr.rel (0) target = $region29
  $region28: #{simnet_forward.1} parent=0 // pred_region
    _
  $region29: #{simnet_forward.1} parent=0 // pred_fallthru
    _
  %v28 = vld [vmem:[%s0] sm:$0xf]
  %v29 = vld [vmem:[%s0 + $0x4] sm:$0xf]
  %v30 = vld [vmem:[%s0 + $0x8] sm:$0xf]
  %v31 = vld [vmem:[%s0 + $0xc] sm:$0xf]
  %v32 = vld [vmem:[%s0 + $0x10] sm:$0xf]
  %v33 = vld [vmem:[%s0 + $0x14] sm:$0xf]
  %v34 = vld [vmem:[%s0 + $0x18] sm:$0xf]
  %v35 = vld [vmem:[%s0 + $0x1c] sm:$0xf]
  %v36 = vld [vmem:[%s0 + $0x20] sm:$0xf]
  %v37 = vld [vmem:[%s0 + $0x24] sm:$0xf]
  %v38 = vld [vmem:[%s0 + $0x28] sm:$0xf]
  %v39 = vld [vmem:[%s0 + $0x2c] sm:$0xf]
  %v40 = vld [vmem:[%s0 + $0x30] sm:$0xf]
  %v41 = vld [vmem:[%s0 + $0x34] sm:$0xf]
  %v42 = vld [vmem:[%s0 + $0x38] sm:$0xf]
  %v43 = vld [vmem:[%s0 + $0x3c] sm:$0xf]
  %v44 = vld [vmem:[%s1] sm:$0xff]
  %v45 = vld [vmem:[%s1 + $0x8] sm:$0xff]
  %v46 = vld [vmem:[%s1 + $0x10] sm:$0xff]
  %v47 = vld [vmem:[%s1 + $0x18] sm:$0xff]
  %v48 = vld [vmem:[%s1 + $0x20] sm:$0xff]
  %v49 = vld [vmem:[%s1 + $0x28] sm:$0xff]
  %v50 = vld [vmem:[%s1 + $0x30] sm:$0xff]
  %v51 = vld [vmem:[%s1 + $0x38] sm:$0xff]
  %v52 = vld [vmem:[%s1 + $0x40] sm:$0xff]
  %v53 = vld [vmem:[%s1 + $0x48] sm:$0xff]
  %v54 = vld [vmem:[%s1 + $0x50] sm:$0xff]
  %v55 = vld [vmem:[%s1 + $0x58] sm:$0xff]
  %v56 = vld [vmem:[%s1 + $0x60] sm:$0xff]
  %v57 = vld [vmem:[%s1 + $0x68] sm:$0xff]
  %v58 = vld [vmem:[%s1 + $0x70] sm:$0xff]
  %v59 = vld [vmem:[%s1 + $0x78] sm:$0xff]
  %v60 = vld [vmem:[%s2] sm:$0xf]
  %v62 = vperm.slane %v60, 0
  %v63 = vperm.slane %v60, 1
  %v64 = vperm.slane %v60, 2
  %v65 = vperm.slane %v60, 3
  %v86 = vunpack.c.l.b16 %v28
  %v87 = vunpack.c.l.b16 %v29
  %v88 = vunpack.c.l.b16 %v30
  %v89 = vunpack.c.l.b16 %v31
  %v90 = vunpack.c.l.b16 %v32
  %v91 = vunpack.c.l.b16 %v33
  %v92 = vunpack.c.l.b16 %v34
  %v93 = vunpack.c.l.b16 %v35
  %v94 = vunpack.c.l.b16 %v36
  %v95 = vunpack.c.l.b16 %v37
  %v96 = vunpack.c.l.b16 %v38
  %v97 = vunpack.c.l.b16 %v39
  %v98 = vunpack.c.l.b16 %v40
  %v99 = vunpack.c.l.b16 %v41
  %v100 = vunpack.c.l.b16 %v42
  %v101 = vunpack.c.l.b16 %v43
  %v102 = vpack.c.b16 %v87, %v86
  %v103 = vpack.c.b16 %v89, %v88
  %v104 = vpack.c.b16 %v91, %v90
  %v105 = vpack.c.b16 %v93, %v92
  %v106 = vpack.c.b16 %v95, %v94
  %v107 = vpack.c.b16 %v97, %v96
  %v108 = vpack.c.b16 %v99, %v98
  %v109 = vpack.c.b16 %v101, %v100
  %v126 = vunpack.c.l.b16 %v44
  %v127 = vunpack.c.h.b16 %v44
  %v128 = vunpack.c.l.b16 %v45
  %v129 = vunpack.c.h.b16 %v45
  %v130 = vunpack.c.l.b16 %v46
  %v131 = vunpack.c.h.b16 %v46
  %v132 = vunpack.c.l.b16 %v47
  %v133 = vunpack.c.h.b16 %v47
  %v134 = vunpack.c.l.b16 %v48
  %v135 = vunpack.c.h.b16 %v48
  %v136 = vunpack.c.l.b16 %v49
  %v137 = vunpack.c.h.b16 %v49
  %v138 = vunpack.c.l.b16 %v50
  %v139 = vunpack.c.h.b16 %v50
  %v140 = vunpack.c.l.b16 %v51
  %v141 = vunpack.c.h.b16 %v51
  %v142 = vunpack.c.l.b16 %v52
  %v143 = vunpack.c.h.b16 %v52
  %v144 = vunpack.c.l.b16 %v53
  %v145 = vunpack.c.h.b16 %v53
  %v146 = vunpack.c.l.b16 %v54
  %v147 = vunpack.c.h.b16 %v54
  %v148 = vunpack.c.l.b16 %v55
  %v149 = vunpack.c.h.b16 %v55
  %v150 = vunpack.c.l.b16 %v56
  %v151 = vunpack.c.h.b16 %v56
  %v152 = vunpack.c.l.b16 %v57
  %v153 = vunpack.c.h.b16 %v57
  %v154 = vunpack.c.l.b16 %v58
  %v155 = vunpack.c.h.b16 %v58
  %v156 = vunpack.c.l.b16 %v59
  %v157 = vunpack.c.h.b16 %v59
  %v158 = vpack.c.b16 %v130, %v126
  %v159 = vpack.c.b16 %v131, %v127
  %v160 = vpack.c.b16 %v132, %v128
  %v161 = vpack.c.b16 %v133, %v129
  %v162 = vpack.c.b16 %v138, %v134
  %v163 = vpack.c.b16 %v139, %v135
  %v164 = vpack.c.b16 %v140, %v136
  %v165 = vpack.c.b16 %v141, %v137
  %v166 = vpack.c.b16 %v146, %v142
  %v167 = vpack.c.b16 %v147, %v143
  %v168 = vpack.c.b16 %v148, %v144
  %v169 = vpack.c.b16 %v149, %v145
  %v170 = vpack.c.b16 %v154, %v150
  %v171 = vpack.c.b16 %v155, %v151
  %v172 = vpack.c.b16 %v156, %v152
  %v173 = vpack.c.b16 %v157, %v153
  %vm190 = vcmask 523264
  %v192 = vsel %vm190, %v102, 0
  %v195 = vsel %vm190, %v103, 0
  %v198 = vsel %vm190, %v104, 0
  %v201 = vsel %vm190, %v105, 0
  %v204 = vsel %vm190, %v106, 0
  %v207 = vsel %vm190, %v107, 0
  %v210 = vsel %vm190, %v108, 0
  %v213 = vsel %vm190, %v109, 0
  %215 = vmatpush.bf16.msra.mxu0 0
  %216 = vmatpush.bf16.msra.mxu0 0
  %217 = vmatpush.bf16.msra.mxu0 0
  %218 = vmatpush.bf16.msra.mxu0 0
  %219 = vmatpush.bf16.msra.mxu0 %v170
  %220 = vmatpush.bf16.msra.mxu0 %v166
  %221 = vmatpush.bf16.msra.mxu0 %v162
  %222 = vmatpush.bf16.msra.mxu0 %v158
  %223 = vmatmul.bf16.gmra.mxu0 %v192
  %v224 = vpop.f32.mrf.mxu0
  %v225 = vadd.f32 %v62, %v224
  %v226 = vpop.f32.mrf.mxu0
  %v227 = vadd.f32 %v62, %v226
  %228 = vmatmul.bf16.gmra.mxu0 %v195
  %v229 = vpop.f32.mrf.mxu0
  %v230 = vadd.f32 %v62, %v229
  %v231 = vpop.f32.mrf.mxu0
  %v232 = vadd.f32 %v62, %v231
  %233 = vmatmul.bf16.gmra.mxu0 %v198
  %v234 = vpop.f32.mrf.mxu0
  %v235 = vadd.f32 %v62, %v234
  %v236 = vpop.f32.mrf.mxu0
  %v237 = vadd.f32 %v62, %v236
  %238 = vmatmul.bf16.gmra.mxu0 %v201
  %v239 = vpop.f32.mrf.mxu0
  %v240 = vadd.f32 %v62, %v239
  %v241 = vpop.f32.mrf.mxu0
  %v242 = vadd.f32 %v62, %v241
  %243 = vmatmul.bf16.gmra.mxu0 %v204
  %v244 = vpop.f32.mrf.mxu0
  %v245 = vadd.f32 %v62, %v244
  %v246 = vpop.f32.mrf.mxu0
  %v247 = vadd.f32 %v62, %v246
  %248 = vmatmul.bf16.gmra.mxu0 %v207
  %v249 = vpop.f32.mrf.mxu0
  %v250 = vadd.f32 %v62, %v249
  %v251 = vpop.f32.mrf.mxu0
  %v252 = vadd.f32 %v62, %v251
  %253 = vmatmul.bf16.gmra.mxu0 %v210
  %v254 = vpop.f32.mrf.mxu0
  %v255 = vadd.f32 %v62, %v254
  %v256 = vpop.f32.mrf.mxu0
  %v257 = vadd.f32 %v62, %v256
  %258 = vmatmul.bf16.gmra.mxu0 %v213
  %v259 = vpop.f32.mrf.mxu0
  %v260 = vadd.f32 %v62, %v259
  %v261 = vpop.f32.mrf.mxu0
  %v262 = vadd.f32 %v62, %v261
  %263 = vdwg.mxu0
  %264 = vmatpush.bf16.msra.mxu0 0
  %265 = vmatpush.bf16.msra.mxu0 0
  %266 = vmatpush.bf16.msra.mxu0 0
  %267 = vmatpush.bf16.msra.mxu0 0
  %268 = vmatpush.bf16.msra.mxu0 %v171
  %269 = vmatpush.bf16.msra.mxu0 %v167
  %270 = vmatpush.bf16.msra.mxu0 %v163
  %271 = vmatpush.bf16.msra.mxu0 %v159
  %272 = vmatmul.bf16.gmra.mxu0 %v192
  %v273 = vpop.f32.mrf.mxu0
  %v274 = vadd.f32 %v63, %v273
  %v275 = vpop.f32.mrf.mxu0
  %v276 = vadd.f32 %v63, %v275
  %277 = vmatmul.bf16.gmra.mxu0 %v195
  %v278 = vpop.f32.mrf.mxu0
  %v279 = vadd.f32 %v63, %v278
  %v280 = vpop.f32.mrf.mxu0
  %v281 = vadd.f32 %v63, %v280
  %282 = vmatmul.bf16.gmra.mxu0 %v198
  %v283 = vpop.f32.mrf.mxu0
  %v284 = vadd.f32 %v63, %v283
  %v285 = vpop.f32.mrf.mxu0
  %v286 = vadd.f32 %v63, %v285
  %287 = vmatmul.bf16.gmra.mxu0 %v201
  %v288 = vpop.f32.mrf.mxu0
  %v289 = vadd.f32 %v63, %v288
  %v290 = vpop.f32.mrf.mxu0
  %v291 = vadd.f32 %v63, %v290
  %292 = vmatmul.bf16.gmra.mxu0 %v204
  %v293 = vpop.f32.mrf.mxu0
  %v294 = vadd.f32 %v63, %v293
  %v295 = vpop.f32.mrf.mxu0
  %v296 = vadd.f32 %v63, %v295
  %297 = vmatmul.bf16.gmra.mxu0 %v207
  %v298 = vpop.f32.mrf.mxu0
  %v299 = vadd.f32 %v63, %v298
  %v300 = vpop.f32.mrf.mxu0
  %v301 = vadd.f32 %v63, %v300
  %302 = vmatmul.bf16.gmra.mxu0 %v210
  %v303 = vpop.f32.mrf.mxu0
  %v304 = vadd.f32 %v63, %v303
  %v305 = vpop.f32.mrf.mxu0
  %v306 = vadd.f32 %v63, %v305
  %307 = vmatmul.bf16.gmra.mxu0 %v213
  %v308 = vpop.f32.mrf.mxu0
  %v309 = vadd.f32 %v63, %v308
  %v310 = vpop.f32.mrf.mxu0
  %v311 = vadd.f32 %v63, %v310
  %312 = vdwg.mxu0
  %313 = vmatpush.bf16.msra.mxu0 0
  %314 = vmatpush.bf16.msra.mxu0 0
  %315 = vmatpush.bf16.msra.mxu0 0
  %316 = vmatpush.bf16.msra.mxu0 0
  %317 = vmatpush.bf16.msra.mxu0 %v172
  %318 = vmatpush.bf16.msra.mxu0 %v168
  %319 = vmatpush.bf16.msra.mxu0 %v164
  %320 = vmatpush.bf16.msra.mxu0 %v160
  %321 = vmatmul.bf16.gmra.mxu0 %v192
  %v322 = vpop.f32.mrf.mxu0
  %v323 = vadd.f32 %v64, %v322
  %v324 = vpop.f32.mrf.mxu0
  %v325 = vadd.f32 %v64, %v324
  %326 = vmatmul.bf16.gmra.mxu0 %v195
  %v327 = vpop.f32.mrf.mxu0
  %v328 = vadd.f32 %v64, %v327
  %v329 = vpop.f32.mrf.mxu0
  %v330 = vadd.f32 %v64, %v329
  %331 = vmatmul.bf16.gmra.mxu0 %v198
  %v332 = vpop.f32.mrf.mxu0
  %v333 = vadd.f32 %v64, %v332
  %v334 = vpop.f32.mrf.mxu0
  %v335 = vadd.f32 %v64, %v334
  %336 = vmatmul.bf16.gmra.mxu0 %v201
  %v337 = vpop.f32.mrf.mxu0
  %v338 = vadd.f32 %v64, %v337
  %v339 = vpop.f32.mrf.mxu0
  %v340 = vadd.f32 %v64, %v339
  %341 = vmatmul.bf16.gmra.mxu0 %v204
  %v342 = vpop.f32.mrf.mxu0
  %v343 = vadd.f32 %v64, %v342
  %v344 = vpop.f32.mrf.mxu0
  %v345 = vadd.f32 %v64, %v344
  %346 = vmatmul.bf16.gmra.mxu0 %v207
  %v347 = vpop.f32.mrf.mxu0
  %v348 = vadd.f32 %v64, %v347
  %v349 = vpop.f32.mrf.mxu0
  %v350 = vadd.f32 %v64, %v349
  %351 = vmatmul.bf16.gmra.mxu0 %v210
  %v352 = vpop.f32.mrf.mxu0
  %v353 = vadd.f32 %v64, %v352
  %v354 = vpop.f32.mrf.mxu0
  %v355 = vadd.f32 %v64, %v354
  %356 = vmatmul.bf16.gmra.mxu0 %v213
  %v357 = vpop.f32.mrf.mxu0
  %v358 = vadd.f32 %v64, %v357
  %v359 = vpop.f32.mrf.mxu0
  %v360 = vadd.f32 %v64, %v359
  %361 = vdwg.mxu0
  %362 = vmatpush.bf16.msra.mxu0 0
  %363 = vmatpush.bf16.msra.mxu0 0
  %364 = vmatpush.bf16.msra.mxu0 0
  %365 = vmatpush.bf16.msra.mxu0 0
  %366 = vmatpush.bf16.msra.mxu0 %v173
  %367 = vmatpush.bf16.msra.mxu0 %v169
  %368 = vmatpush.bf16.msra.mxu0 %v165
  %369 = vmatpush.bf16.msra.mxu0 %v161
  %370 = vmatmul.bf16.gmra.mxu0 %v192
  %v371 = vpop.f32.mrf.mxu0
  %v372 = vadd.f32 %v65, %v371
  %v373 = vpop.f32.mrf.mxu0
  %v374 = vadd.f32 %v65, %v373
  %375 = vmatmul.bf16.gmra.mxu0 %v195
  %v376 = vpop.f32.mrf.mxu0
  %v377 = vadd.f32 %v65, %v376
  %v378 = vpop.f32.mrf.mxu0
  %v379 = vadd.f32 %v65, %v378
  %380 = vmatmul.bf16.gmra.mxu0 %v198
  %v381 = vpop.f32.mrf.mxu0
  %v382 = vadd.f32 %v65, %v381
  %v383 = vpop.f32.mrf.mxu0
  %v384 = vadd.f32 %v65, %v383
  %385 = vmatmul.bf16.gmra.mxu0 %v201
  %v386 = vpop.f32.mrf.mxu0
  %v387 = vadd.f32 %v65, %v386
  %v388 = vpop.f32.mrf.mxu0
  %v389 = vadd.f32 %v65, %v388
  %390 = vmatmul.bf16.gmra.mxu0 %v204
  %v391 = vpop.f32.mrf.mxu0
  %v392 = vadd.f32 %v65, %v391
  %v393 = vpop.f32.mrf.mxu0
  %v394 = vadd.f32 %v65, %v393
  %395 = vmatmul.bf16.gmra.mxu0 %v207
  %v396 = vpop.f32.mrf.mxu0
  %v397 = vadd.f32 %v65, %v396
  %v398 = vpop.f32.mrf.mxu0
  %v399 = vadd.f32 %v65, %v398
  %400 = vmatmul.bf16.gmra.mxu0 %v210
  %v401 = vpop.f32.mrf.mxu0
  %v402 = vadd.f32 %v65, %v401
  %v403 = vpop.f32.mrf.mxu0
  %v404 = vadd.f32 %v65, %v403
  %405 = vmatmul.bf16.gmra.mxu0 %v213
  %v406 = vpop.f32.mrf.mxu0
  %v407 = vadd.f32 %v65, %v406
  %v408 = vpop.f32.mrf.mxu0
  %v409 = vadd.f32 %v65, %v408
  %410 = vdwg.mxu0
  %v411 = vmax.f32 %v225, 0.0
  %v412 = vmax.f32 %v274, 0.0
  %v413 = vmax.f32 %v323, 0.0
  %v414 = vmax.f32 %v372, 0.0
  %v415 = vmax.f32 %v227, 0.0
  %v416 = vmax.f32 %v276, 0.0
  %v417 = vmax.f32 %v325, 0.0
  %v418 = vmax.f32 %v374, 0.0
  %v419 = vmax.f32 %v230, 0.0
  %v420 = vmax.f32 %v279, 0.0
  %v421 = vmax.f32 %v328, 0.0
  %v422 = vmax.f32 %v377, 0.0
  %v423 = vmax.f32 %v232, 0.0
  %v424 = vmax.f32 %v281, 0.0
  %v425 = vmax.f32 %v330, 0.0
  %v426 = vmax.f32 %v379, 0.0
  %v427 = vmax.f32 %v235, 0.0
  %v428 = vmax.f32 %v284, 0.0
  %v429 = vmax.f32 %v333, 0.0
  %v430 = vmax.f32 %v382, 0.0
  %v431 = vmax.f32 %v237, 0.0
  %v432 = vmax.f32 %v286, 0.0
  %v433 = vmax.f32 %v335, 0.0
  %v434 = vmax.f32 %v384, 0.0
  %v435 = vmax.f32 %v240, 0.0
  %v436 = vmax.f32 %v289, 0.0
  %v437 = vmax.f32 %v338, 0.0
  %v438 = vmax.f32 %v387, 0.0
  %v439 = vmax.f32 %v242, 0.0
  %v440 = vmax.f32 %v291, 0.0
  %v441 = vmax.f32 %v340, 0.0
  %v442 = vmax.f32 %v389, 0.0
  %v443 = vmax.f32 %v245, 0.0
  %v444 = vmax.f32 %v294, 0.0
  %v445 = vmax.f32 %v343, 0.0
  %v446 = vmax.f32 %v392, 0.0
  %v447 = vmax.f32 %v247, 0.0
  %v448 = vmax.f32 %v296, 0.0
  %v449 = vmax.f32 %v345, 0.0
  %v450 = vmax.f32 %v394, 0.0
  %v451 = vmax.f32 %v250, 0.0
  %v452 = vmax.f32 %v299, 0.0
  %v453 = vmax.f32 %v348, 0.0
  %v454 = vmax.f32 %v397, 0.0
  %v455 = vmax.f32 %v252, 0.0
  %v456 = vmax.f32 %v301, 0.0
  %v457 = vmax.f32 %v350, 0.0
  %v458 = vmax.f32 %v399, 0.0
  %v459 = vmax.f32 %v255, 0.0
  %v460 = vmax.f32 %v304, 0.0
  %v461 = vmax.f32 %v353, 0.0
  %v462 = vmax.f32 %v402, 0.0
  %v463 = vmax.f32 %v257, 0.0
  %v464 = vmax.f32 %v306, 0.0
  %v465 = vmax.f32 %v355, 0.0
  %v466 = vmax.f32 %v404, 0.0
  %v467 = vmax.f32 %v260, 0.0
  %v468 = vmax.f32 %v309, 0.0
  %v469 = vmax.f32 %v358, 0.0
  %v470 = vmax.f32 %v407, 0.0
  %v471 = vmax.f32 %v262, 0.0
  %v472 = vmax.f32 %v311, 0.0
  %v473 = vmax.f32 %v360, 0.0
  %v474 = vmax.f32 %v409, 0.0
  %v475 = vpack.c.bf16 %v415, %v411
  %v476 = vpack.c.bf16 %v416, %v412
  %v477 = vpack.c.bf16 %v417, %v413
  %v478 = vpack.c.bf16 %v418, %v414
  %v479 = vpack.c.bf16 %v423, %v419
  %v480 = vpack.c.bf16 %v424, %v420
  %v481 = vpack.c.bf16 %v425, %v421
  %v482 = vpack.c.bf16 %v426, %v422
  %v483 = vpack.c.bf16 %v431, %v427
  %v484 = vpack.c.bf16 %v432, %v428
  %v485 = vpack.c.bf16 %v433, %v429
  %v486 = vpack.c.bf16 %v434, %v430
  %v487 = vpack.c.bf16 %v439, %v435
  %v488 = vpack.c.bf16 %v440, %v436
  %v489 = vpack.c.bf16 %v441, %v437
  %v490 = vpack.c.bf16 %v442, %v438
  %v491 = vpack.c.bf16 %v447, %v443
  %v492 = vpack.c.bf16 %v448, %v444
  %v493 = vpack.c.bf16 %v449, %v445
  %v494 = vpack.c.bf16 %v450, %v446
  %v495 = vpack.c.bf16 %v455, %v451
  %v496 = vpack.c.bf16 %v456, %v452
  %v497 = vpack.c.bf16 %v457, %v453
  %v498 = vpack.c.bf16 %v458, %v454
  %v499 = vpack.c.bf16 %v463, %v459
  %v500 = vpack.c.bf16 %v464, %v460
  %v501 = vpack.c.bf16 %v465, %v461
  %v502 = vpack.c.bf16 %v466, %v462
  %v503 = vpack.c.bf16 %v471, %v467
  %v504 = vpack.c.bf16 %v472, %v468
  %v505 = vpack.c.bf16 %v473, %v469
  %v506 = vpack.c.bf16 %v474, %v470
  %v507 = vld [vmem:[%s3] sm:$0xf]
  %v508 = vld [vmem:[%s3 + $0x4] sm:$0xf]
  %v509 = vld [vmem:[%s3 + $0x8] sm:$0xf]
  %v510 = vld [vmem:[%s3 + $0xc] sm:$0xf]
  %v511 = vld [vmem:[%s3 + $0x10] sm:$0xf]
  %v512 = vld [vmem:[%s3 + $0x14] sm:$0xf]
  %v513 = vld [vmem:[%s3 + $0x18] sm:$0xf]
  %v514 = vld [vmem:[%s3 + $0x1c] sm:$0xf]
  %v515 = vld [vmem:[%s3 + $0x20] sm:$0xf]
  %v516 = vld [vmem:[%s3 + $0x24] sm:$0xf]
  %v517 = vld [vmem:[%s3 + $0x28] sm:$0xf]
  %v518 = vld [vmem:[%s3 + $0x2c] sm:$0xf]
  %v519 = vld [vmem:[%s3 + $0x30] sm:$0xf]
  %v520 = vld [vmem:[%s3 + $0x34] sm:$0xf]
  %v521 = vld [vmem:[%s3 + $0x38] sm:$0xf]
  %v522 = vld [vmem:[%s3 + $0x3c] sm:$0xf]
  %v523 = vld [vmem:[%s3 + $0x40] sm:$0xf]
  %v524 = vld [vmem:[%s3 + $0x44] sm:$0xf]
  %v525 = vld [vmem:[%s3 + $0x48] sm:$0xf]
  %v526 = vld [vmem:[%s3 + $0x4c] sm:$0xf]
  %v527 = vld [vmem:[%s3 + $0x50] sm:$0xf]
  %v528 = vld [vmem:[%s3 + $0x54] sm:$0xf]
  %v529 = vld [vmem:[%s3 + $0x58] sm:$0xf]
  %v530 = vld [vmem:[%s3 + $0x5c] sm:$0xf]
  %v531 = vld [vmem:[%s3 + $0x60] sm:$0xf]
  %v532 = vld [vmem:[%s3 + $0x64] sm:$0xf]
  %v533 = vld [vmem:[%s3 + $0x68] sm:$0xf]
  %v534 = vld [vmem:[%s3 + $0x6c] sm:$0xf]
  %v535 = vld [vmem:[%s3 + $0x70] sm:$0xf]
  %v536 = vld [vmem:[%s3 + $0x74] sm:$0xf]
  %v537 = vld [vmem:[%s3 + $0x78] sm:$0xf]
  %v538 = vld [vmem:[%s3 + $0x7c] sm:$0xf]
  %v539 = vld [vmem:[%s3 + $0x80] sm:$0xf]
  %v540 = vld [vmem:[%s3 + $0x84] sm:$0xf]
  %v541 = vld [vmem:[%s3 + $0x88] sm:$0xf]
  %v542 = vld [vmem:[%s3 + $0x8c] sm:$0xf]
  %v543 = vld [vmem:[%s3 + $0x90] sm:$0xf]
  %v544 = vld [vmem:[%s3 + $0x94] sm:$0xf]
  %v545 = vld [vmem:[%s3 + $0x98] sm:$0xf]
  %v546 = vld [vmem:[%s3 + $0x9c] sm:$0xf]
  %v547 = vld [vmem:[%s3 + $0xa0] sm:$0xf]
  %v548 = vld [vmem:[%s3 + $0xa4] sm:$0xf]
  %v549 = vld [vmem:[%s3 + $0xa8] sm:$0xf]
  %v550 = vld [vmem:[%s3 + $0xac] sm:$0xf]
  %v551 = vld [vmem:[%s3 + $0xb0] sm:$0xf]
  %v552 = vld [vmem:[%s3 + $0xb4] sm:$0xf]
  %v553 = vld [vmem:[%s3 + $0xb8] sm:$0xf]
  %v554 = vld [vmem:[%s3 + $0xbc] sm:$0xf]
  %v555 = vld [vmem:[%s3 + $0xc0] sm:$0xf]
  %v556 = vld [vmem:[%s3 + $0xc4] sm:$0xf]
  %v557 = vld [vmem:[%s3 + $0xc8] sm:$0xf]
  %v558 = vld [vmem:[%s3 + $0xcc] sm:$0xf]
  %v559 = vld [vmem:[%s3 + $0xd0] sm:$0xf]
  %v560 = vld [vmem:[%s3 + $0xd4] sm:$0xf]
  %v561 = vld [vmem:[%s3 + $0xd8] sm:$0xf]
  %v562 = vld [vmem:[%s3 + $0xdc] sm:$0xf]
  %v563 = vld [vmem:[%s3 + $0xe0] sm:$0xf]
  %v564 = vld [vmem:[%s3 + $0xe4] sm:$0xf]
  %v565 = vld [vmem:[%s3 + $0xe8] sm:$0xf]
  %v566 = vld [vmem:[%s3 + $0xec] sm:$0xf]
  %v567 = vld [vmem:[%s3 + $0xf0] sm:$0xf]
  %v568 = vld [vmem:[%s3 + $0xf4] sm:$0xf]
  %v569 = vld [vmem:[%s3 + $0xf8] sm:$0xf]
  %v570 = vld [vmem:[%s3 + $0xfc] sm:$0xf]
  %v571 = vld [vmem:[%s4] sm:$0x1]
  %v573 = vperm.slane %v571, 0
  %v639 = vunpack.c.l.b16 %v507
  %v640 = vunpack.c.l.b16 %v508
  %v641 = vunpack.c.l.b16 %v509
  %v642 = vunpack.c.l.b16 %v510
  %v643 = vunpack.c.l.b16 %v511
  %v644 = vunpack.c.l.b16 %v512
  %v645 = vunpack.c.l.b16 %v513
  %v646 = vunpack.c.l.b16 %v514
  %v647 = vunpack.c.l.b16 %v515
  %v648 = vunpack.c.l.b16 %v516
  %v649 = vunpack.c.l.b16 %v517
  %v650 = vunpack.c.l.b16 %v518
  %v651 = vunpack.c.l.b16 %v519
  %v652 = vunpack.c.l.b16 %v520
  %v653 = vunpack.c.l.b16 %v521
  %v654 = vunpack.c.l.b16 %v522
  %v655 = vunpack.c.l.b16 %v523
  %v656 = vunpack.c.l.b16 %v524
  %v657 = vunpack.c.l.b16 %v525
  %v658 = vunpack.c.l.b16 %v526
  %v659 = vunpack.c.l.b16 %v527
  %v660 = vunpack.c.l.b16 %v528
  %v661 = vunpack.c.l.b16 %v529
  %v662 = vunpack.c.l.b16 %v530
  %v663 = vunpack.c.l.b16 %v531
  %v664 = vunpack.c.l.b16 %v532
  %v665 = vunpack.c.l.b16 %v533
  %v666 = vunpack.c.l.b16 %v534
  %v667 = vunpack.c.l.b16 %v535
  %v668 = vunpack.c.l.b16 %v536
  %v669 = vunpack.c.l.b16 %v537
  %v670 = vunpack.c.l.b16 %v538
  %v671 = vunpack.c.l.b16 %v539
  %v672 = vunpack.c.l.b16 %v540
  %v673 = vunpack.c.l.b16 %v541
  %v674 = vunpack.c.l.b16 %v542
  %v675 = vunpack.c.l.b16 %v543
  %v676 = vunpack.c.l.b16 %v544
  %v677 = vunpack.c.l.b16 %v545
  %v678 = vunpack.c.l.b16 %v546
  %v679 = vunpack.c.l.b16 %v547
  %v680 = vunpack.c.l.b16 %v548
  %v681 = vunpack.c.l.b16 %v549
  %v682 = vunpack.c.l.b16 %v550
  %v683 = vunpack.c.l.b16 %v551
  %v684 = vunpack.c.l.b16 %v552
  %v685 = vunpack.c.l.b16 %v553
  %v686 = vunpack.c.l.b16 %v554
  %v687 = vunpack.c.l.b16 %v555
  %v688 = vunpack.c.l.b16 %v556
  %v689 = vunpack.c.l.b16 %v557
  %v690 = vunpack.c.l.b16 %v558
  %v691 = vunpack.c.l.b16 %v559
  %v692 = vunpack.c.l.b16 %v560
  %v693 = vunpack.c.l.b16 %v561
  %v694 = vunpack.c.l.b16 %v562
  %v695 = vunpack.c.l.b16 %v563
  %v696 = vunpack.c.l.b16 %v564
  %v697 = vunpack.c.l.b16 %v565
  %v698 = vunpack.c.l.b16 %v566
  %v699 = vunpack.c.l.b16 %v567
  %v700 = vunpack.c.l.b16 %v568
  %v701 = vunpack.c.l.b16 %v569
  %v702 = vunpack.c.l.b16 %v570
  %v703 = vpack.c.b16 %v640, %v639
  %v704 = vpack.c.b16 %v642, %v641
  %v705 = vpack.c.b16 %v644, %v643
  %v706 = vpack.c.b16 %v646, %v645
  %v707 = vpack.c.b16 %v648, %v647
  %v708 = vpack.c.b16 %v650, %v649
  %v709 = vpack.c.b16 %v652, %v651
  %v710 = vpack.c.b16 %v654, %v653
  %v711 = vpack.c.b16 %v656, %v655
  %v712 = vpack.c.b16 %v658, %v657
  %v713 = vpack.c.b16 %v660, %v659
  %v714 = vpack.c.b16 %v662, %v661
  %v715 = vpack.c.b16 %v664, %v663
  %v716 = vpack.c.b16 %v666, %v665
  %v717 = vpack.c.b16 %v668, %v667
  %v718 = vpack.c.b16 %v670, %v669
  %v719 = vpack.c.b16 %v672, %v671
  %v720 = vpack.c.b16 %v674, %v673
  %v721 = vpack.c.b16 %v676, %v675
  %v722 = vpack.c.b16 %v678, %v677
  %v723 = vpack.c.b16 %v680, %v679
  %v724 = vpack.c.b16 %v682, %v681
  %v725 = vpack.c.b16 %v684, %v683
  %v726 = vpack.c.b16 %v686, %v685
  %v727 = vpack.c.b16 %v688, %v687
  %v728 = vpack.c.b16 %v690, %v689
  %v729 = vpack.c.b16 %v692, %v691
  %v730 = vpack.c.b16 %v694, %v693
  %v731 = vpack.c.b16 %v696, %v695
  %v732 = vpack.c.b16 %v698, %v697
  %v733 = vpack.c.b16 %v700, %v699
  %v734 = vpack.c.b16 %v702, %v701
  %767 = vmatpush.bf16.msra.mxu0 %v710
  %768 = vmatpush.bf16.msra.mxu0 %v709
  %769 = vmatpush.bf16.msra.mxu0 %v708
  %770 = vmatpush.bf16.msra.mxu0 %v707
  %771 = vmatpush.bf16.msra.mxu0 %v706
  %772 = vmatpush.bf16.msra.mxu0 %v705
  %773 = vmatpush.bf16.msra.mxu0 %v704
  %774 = vmatpush.bf16.msra.mxu0 %v703
  %775 = vmatmul.bf16.gmra.mxu0 %v475
  %v776 = vpop.f32.mrf.mxu0
  %v777 = vadd.f32 %v573, %v776
  %v778 = vpop.f32.mrf.mxu0
  %v779 = vadd.f32 %v573, %v778
  %780 = vmatmul.bf16.gmra.mxu0 %v479
  %v781 = vpop.f32.mrf.mxu0
  %v782 = vadd.f32 %v573, %v781
  %v783 = vpop.f32.mrf.mxu0
  %v784 = vadd.f32 %v573, %v783
  %785 = vmatmul.bf16.gmra.mxu0 %v483
  %v786 = vpop.f32.mrf.mxu0
  %v787 = vadd.f32 %v573, %v786
  %v788 = vpop.f32.mrf.mxu0
  %v789 = vadd.f32 %v573, %v788
  %790 = vmatmul.bf16.gmra.mxu0 %v487
  %v791 = vpop.f32.mrf.mxu0
  %v792 = vadd.f32 %v573, %v791
  %v793 = vpop.f32.mrf.mxu0
  %v794 = vadd.f32 %v573, %v793
  %795 = vmatmul.bf16.gmra.mxu0 %v491
  %v796 = vpop.f32.mrf.mxu0
  %v797 = vadd.f32 %v573, %v796
  %v798 = vpop.f32.mrf.mxu0
  %v799 = vadd.f32 %v573, %v798
  %800 = vmatmul.bf16.gmra.mxu0 %v495
  %v801 = vpop.f32.mrf.mxu0
  %v802 = vadd.f32 %v573, %v801
  %v803 = vpop.f32.mrf.mxu0
  %v804 = vadd.f32 %v573, %v803
  %805 = vmatmul.bf16.gmra.mxu0 %v499
  %v806 = vpop.f32.mrf.mxu0
  %v807 = vadd.f32 %v573, %v806
  %v808 = vpop.f32.mrf.mxu0
  %v809 = vadd.f32 %v573, %v808
  %810 = vmatmul.bf16.gmra.mxu0 %v503
  %v811 = vpop.f32.mrf.mxu0
  %v812 = vadd.f32 %v573, %v811
  %v813 = vpop.f32.mrf.mxu0
  %v814 = vadd.f32 %v573, %v813
  %815 = vdwg.mxu0
  %816 = vmatpush.bf16.msra.mxu0 %v718
  %817 = vmatpush.bf16.msra.mxu0 %v717
  %818 = vmatpush.bf16.msra.mxu0 %v716
  %819 = vmatpush.bf16.msra.mxu0 %v715
  %820 = vmatpush.bf16.msra.mxu0 %v714
  %821 = vmatpush.bf16.msra.mxu0 %v713
  %822 = vmatpush.bf16.msra.mxu0 %v712
  %823 = vmatpush.bf16.msra.mxu0 %v711
  %824 = vmatmul.bf16.gmra.mxu0 %v476
  %v825 = vpop.f32.mrf.mxu0
  %v826 = vadd.f32 %v777, %v825
  %v827 = vpop.f32.mrf.mxu0
  %v828 = vadd.f32 %v779, %v827
  %829 = vmatmul.bf16.gmra.mxu0 %v480
  %v830 = vpop.f32.mrf.mxu0
  %v831 = vadd.f32 %v782, %v830
  %v832 = vpop.f32.mrf.mxu0
  %v833 = vadd.f32 %v784, %v832
  %834 = vmatmul.bf16.gmra.mxu0 %v484
  %v835 = vpop.f32.mrf.mxu0
  %v836 = vadd.f32 %v787, %v835
  %v837 = vpop.f32.mrf.mxu0
  %v838 = vadd.f32 %v789, %v837
  %839 = vmatmul.bf16.gmra.mxu0 %v488
  %v840 = vpop.f32.mrf.mxu0
  %v841 = vadd.f32 %v792, %v840
  %v842 = vpop.f32.mrf.mxu0
  %v843 = vadd.f32 %v794, %v842
  %844 = vmatmul.bf16.gmra.mxu0 %v492
  %v845 = vpop.f32.mrf.mxu0
  %v846 = vadd.f32 %v797, %v845
  %v847 = vpop.f32.mrf.mxu0
  %v848 = vadd.f32 %v799, %v847
  %849 = vmatmul.bf16.gmra.mxu0 %v496
  %v850 = vpop.f32.mrf.mxu0
  %v851 = vadd.f32 %v802, %v850
  %v852 = vpop.f32.mrf.mxu0
  %v853 = vadd.f32 %v804, %v852
  %854 = vmatmul.bf16.gmra.mxu0 %v500
  %v855 = vpop.f32.mrf.mxu0
  %v856 = vadd.f32 %v807, %v855
  %v857 = vpop.f32.mrf.mxu0
  %v858 = vadd.f32 %v809, %v857
  %859 = vmatmul.bf16.gmra.mxu0 %v504
  %v860 = vpop.f32.mrf.mxu0
  %v861 = vadd.f32 %v812, %v860
  %v862 = vpop.f32.mrf.mxu0
  %v863 = vadd.f32 %v814, %v862
  %864 = vdwg.mxu0
  %865 = vmatpush.bf16.msra.mxu0 %v726
  %866 = vmatpush.bf16.msra.mxu0 %v725
  %867 = vmatpush.bf16.msra.mxu0 %v724
  %868 = vmatpush.bf16.msra.mxu0 %v723
  %869 = vmatpush.bf16.msra.mxu0 %v722
  %870 = vmatpush.bf16.msra.mxu0 %v721
  %871 = vmatpush.bf16.msra.mxu0 %v720
  %872 = vmatpush.bf16.msra.mxu0 %v719
  %873 = vmatmul.bf16.gmra.mxu0 %v477
  %v874 = vpop.f32.mrf.mxu0
  %v875 = vadd.f32 %v826, %v874
  %v876 = vpop.f32.mrf.mxu0
  %v877 = vadd.f32 %v828, %v876
  %878 = vmatmul.bf16.gmra.mxu0 %v481
  %v879 = vpop.f32.mrf.mxu0
  %v880 = vadd.f32 %v831, %v879
  %v881 = vpop.f32.mrf.mxu0
  %v882 = vadd.f32 %v833, %v881
  %883 = vmatmul.bf16.gmra.mxu0 %v485
  %v884 = vpop.f32.mrf.mxu0
  %v885 = vadd.f32 %v836, %v884
  %v886 = vpop.f32.mrf.mxu0
  %v887 = vadd.f32 %v838, %v886
  %888 = vmatmul.bf16.gmra.mxu0 %v489
  %v889 = vpop.f32.mrf.mxu0
  %v890 = vadd.f32 %v841, %v889
  %v891 = vpop.f32.mrf.mxu0
  %v892 = vadd.f32 %v843, %v891
  %893 = vmatmul.bf16.gmra.mxu0 %v493
  %v894 = vpop.f32.mrf.mxu0
  %v895 = vadd.f32 %v846, %v894
  %v896 = vpop.f32.mrf.mxu0
  %v897 = vadd.f32 %v848, %v896
  %898 = vmatmul.bf16.gmra.mxu0 %v497
  %v899 = vpop.f32.mrf.mxu0
  %v900 = vadd.f32 %v851, %v899
  %v901 = vpop.f32.mrf.mxu0
  %v902 = vadd.f32 %v853, %v901
  %903 = vmatmul.bf16.gmra.mxu0 %v501
  %v904 = vpop.f32.mrf.mxu0
  %v905 = vadd.f32 %v856, %v904
  %v906 = vpop.f32.mrf.mxu0
  %v907 = vadd.f32 %v858, %v906
  %908 = vmatmul.bf16.gmra.mxu0 %v505
  %v909 = vpop.f32.mrf.mxu0
  %v910 = vadd.f32 %v861, %v909
  %v911 = vpop.f32.mrf.mxu0
  %v912 = vadd.f32 %v863, %v911
  %913 = vdwg.mxu0
  %914 = vmatpush.bf16.msra.mxu0 %v734
  %915 = vmatpush.bf16.msra.mxu0 %v733
  %916 = vmatpush.bf16.msra.mxu0 %v732
  %917 = vmatpush.bf16.msra.mxu0 %v731
  %918 = vmatpush.bf16.msra.mxu0 %v730
  %919 = vmatpush.bf16.msra.mxu0 %v729
  %920 = vmatpush.bf16.msra.mxu0 %v728
  %921 = vmatpush.bf16.msra.mxu0 %v727
  %922 = vmatmul.bf16.gmra.mxu0 %v478
  %v923 = vpop.f32.mrf.mxu0
  %v924 = vadd.f32 %v875, %v923
  %v925 = vpop.f32.mrf.mxu0
  %v926 = vadd.f32 %v877, %v925
  %927 = vmatmul.bf16.gmra.mxu0 %v482
  %v928 = vpop.f32.mrf.mxu0
  %v929 = vadd.f32 %v880, %v928
  %v930 = vpop.f32.mrf.mxu0
  %v931 = vadd.f32 %v882, %v930
  %932 = vmatmul.bf16.gmra.mxu0 %v486
  %v933 = vpop.f32.mrf.mxu0
  %v934 = vadd.f32 %v885, %v933
  %v935 = vpop.f32.mrf.mxu0
  %v936 = vadd.f32 %v887, %v935
  %937 = vmatmul.bf16.gmra.mxu0 %v490
  %v938 = vpop.f32.mrf.mxu0
  %v939 = vadd.f32 %v890, %v938
  %v940 = vpop.f32.mrf.mxu0
  %v941 = vadd.f32 %v892, %v940
  %942 = vmatmul.bf16.gmra.mxu0 %v494
  %v943 = vpop.f32.mrf.mxu0
  %v944 = vadd.f32 %v895, %v943
  %v945 = vpop.f32.mrf.mxu0
  %v946 = vadd.f32 %v897, %v945
  %947 = vmatmul.bf16.gmra.mxu0 %v498
  %v948 = vpop.f32.mrf.mxu0
  %v949 = vadd.f32 %v900, %v948
  %v950 = vpop.f32.mrf.mxu0
  %v951 = vadd.f32 %v902, %v950
  %952 = vmatmul.bf16.gmra.mxu0 %v502
  %v953 = vpop.f32.mrf.mxu0
  %v954 = vadd.f32 %v905, %v953
  %v955 = vpop.f32.mrf.mxu0
  %v956 = vadd.f32 %v907, %v955
  %957 = vmatmul.bf16.gmra.mxu0 %v506
  %v958 = vpop.f32.mrf.mxu0
  %v959 = vadd.f32 %v910, %v958
  %v960 = vpop.f32.mrf.mxu0
  %v961 = vadd.f32 %v912, %v960
  %962 = vdwg.mxu0
  %v963 = vmax.f32 %v924, 0.0
  %v964 = vmax.f32 %v926, 0.0
  %v965 = vmax.f32 %v929, 0.0
  %v966 = vmax.f32 %v931, 0.0
  %v967 = vmax.f32 %v934, 0.0
  %v968 = vmax.f32 %v936, 0.0
  %v969 = vmax.f32 %v939, 0.0
  %v970 = vmax.f32 %v941, 0.0
  %v971 = vmax.f32 %v944, 0.0
  %v972 = vmax.f32 %v946, 0.0
  %v973 = vmax.f32 %v949, 0.0
  %v974 = vmax.f32 %v951, 0.0
  %v975 = vmax.f32 %v954, 0.0
  %v976 = vmax.f32 %v956, 0.0
  %v977 = vmax.f32 %v959, 0.0
  %v978 = vmax.f32 %v961, 0.0
  %v979 = vld [vmem:[%s5] sm:$0x1]
  %v980 = vpack.c.bf16 %v964, %v963
  %v981 = vpack.c.bf16 %v966, %v965
  %v982 = vpack.c.bf16 %v968, %v967
  %v983 = vpack.c.bf16 %v970, %v969
  %v984 = vpack.c.bf16 %v972, %v971
  %v985 = vpack.c.bf16 %v974, %v973
  %v986 = vpack.c.bf16 %v976, %v975
  %v987 = vpack.c.bf16 %v978, %v977
  %s988 = sld [smem:[#allocation2]]
  %v989 = vstv %s988
  %990 = vmatpush.bf16.xpose.msra.mxu0 %v987
  %991 = vmatpush.bf16.xpose.msra.mxu0 %v986
  %992 = vmatpush.bf16.xpose.msra.mxu0 %v985
  %993 = vmatpush.bf16.xpose.msra.mxu0 %v984
  %994 = vmatpush.bf16.xpose.msra.mxu0 %v983
  %995 = vmatpush.bf16.xpose.msra.mxu0 %v982
  %996 = vmatpush.bf16.xpose.msra.mxu0 %v981
  %997 = vmatpush.bf16.xpose.msra.mxu0 %v980
  %998 = vmatmul.bf16.gmra.mxu0 %v979
  %v999 = vpop.f32.mrf.mxu0
  %v1000 = vadd.f32 %v989, %v999
  %v1001 = vpop.f32.mrf.mxu0
  %1002 = vdwg.mxu0
  %v1003 = vxor.u32 %v1000, 2147483648
  %v1004 = vmul.f32 %v1003, 1.442695
  %v1005 = vpow.pop %v1004
  %v1006 = vadd.f32 %v1005, 1.0
  %v1007 = vrcp.pop %v1006
  %v1008 = vmul.f32 %v1006, %v1007
  %v1009 = vsub.f32 1.0, %v1008
  %v1010 = vmul.f32 %v1007, %v1009
  %v1011 = vadd.f32 %v1007, %v1010
  %vm1012 = vweird.f32 %v1006
  %vm1013 = vweird.f32 %v1007
  %vm1014 = vmor %vm1012, %vm1013
  %v1015 = vsel %vm1014, %v1007, %v1011
  %v1016 = vand.u32 2147483647, %v1006
  %vm1017 = vcmp.eq.f32.partialorder %v1016, 8.507059e+37
  %v1018 = vand.u32 %v1006, 2147483648
  %v1019 = vor.u32 1.1754944e-38, %v1018
  %v1020 = vsel %vm1017, %v1019, %v1015
  %v1021 = vmul.f32 1.0, %v1020
  %1022 = vst [vmem:[%s7] sm:$0x1] %v1021
  // Predicated region
  $region30: #{simnet_forward.1} parent=0 // pred_check
    _
  $region31: #{simnet_forward.1} parent=0 // pred_check_branch
    %1024 = sbr.rel (0) target = $region33
  $region32: #{simnet_forward.1} parent=0 // pred_region
    _
  $region33: #{simnet_forward.1} parent=0 // pred_fallthru
    _
  // Predicated region
  $region34: #{simnet_forward.1} parent=0 // pred_check
    _
  $region35: #{simnet_forward.1} parent=0 // pred_check_branch
    %1026 = sbr.rel (0) target = $region37
  $region36: #{simnet_forward.1} parent=0 // pred_region
    _
  $region37: #{simnet_forward.1} parent=0 // pred_fallthru
    _

</llo_original>
